<compile_context>
chip_gen: v5e
topology: v5e:2x2
jax: 0.10.0
libtpu: 0.0.40
codegen_flags: <defaults>
</compile_context>

<pallas_src>
import functools
import math

import jax
import jax.numpy as jnp
from jax import lax
from jax.experimental import pallas as pl
from jax.experimental.pallas import tpu as pltpu


def _round_up(x, m):
    return ((x + m - 1) // m) * m


def attention_head_kernel(x_ref, wqkv_ref, bqkv_ref, o_ref, *,
                          hp, s_valid, approx_recip):
    # x_ref:    (Bt, Sp, E)   current batch tile (Sp = sublane-padded seq)
    # wqkv_ref: (E, 3*Hp)     fused, head-dim-padded, Q-prescaled weights
    # bqkv_ref: (1, 3*Hp)     fused, padded, Q-prescaled biases (f32)
    # o_ref:    (Bt, Sp, Hp)  lane-dense output tile
    bt, sp, ed = x_ref.shape
    mm_dtype = x_ref.dtype

    # Fused QKV projection: one lane-dense MXU matmul, f32 accumulation.
    x2 = x_ref[...].reshape(bt * sp, ed)                       # (Bt*Sp, E)
    qkv = jnp.dot(x2, wqkv_ref[...],
                  preferred_element_type=jnp.float32)          # (Bt*Sp, 3*Hp) f32
    qkv = qkv + bqkv_ref[...]

    # Cast back to the activation dtype for the attention matmuls (bf16 MXU
    # path when x is bf16; no-op for f32 inputs).  Padded head columns are
    # zero and contribute nothing to scores or output.
    q = qkv[:, 0 * hp:1 * hp].astype(mm_dtype).reshape(bt, sp, hp)
    k = qkv[:, 1 * hp:2 * hp].astype(mm_dtype).reshape(bt, sp, hp)
    v = qkv[:, 2 * hp:3 * hp].astype(mm_dtype).reshape(bt, sp, hp)

    # Scores: 1/sqrt(head_dim) is already folded into the Q weights/bias.
    scores = jnp.einsum("bqh,bkh->bqk", q, k,
                        preferred_element_type=jnp.float32)     # (Bt, Sp, Sp)

    # Mask padded key rows (only when Sp > S); padded query rows are sliced
    # off by the wrapper.
    if s_valid < sp:
        key_idx = lax.broadcasted_iota(jnp.int32, (1, 1, sp), 2)
        scores = jnp.where(key_idx < s_valid, scores, -1e30)

    # Numerically-stable softmax, normalization deferred past the PV matmul.
    m = jnp.max(scores, axis=-1, keepdims=True)
    p = jnp.exp(scores - m)                                     # un-normalized
    denom = jnp.sum(p, axis=-1, keepdims=True)                  # (Bt, Sp, 1)

    out = jnp.einsum("bqk,bkh->bqh", p.astype(mm_dtype), v,
                     preferred_element_type=jnp.float32)        # (Bt, Sp, Hp)
    inv = pl.reciprocal(denom, approx=approx_recip)
    o_ref[...] = (out * inv).astype(o_ref.dtype)


def _vmem_budget_bytes():
    """Generation-aware scoped-VMEM budget with headroom."""
    cap = None
    try:
        info = pltpu.get_tpu_info()
        cap = getattr(info, "vmem_capacity_bytes", None)
    except Exception:
        cap = None
    if cap is None:
        cap = 64 * 1024 * 1024                      # conservative fallback
    if cap <= 64 * 1024 * 1024:                     # v7x-class: 64 MiB per TC
        return 48 * 1024 * 1024
    return 96 * 1024 * 1024                         # v5e/v6e: 128 MiB


def _pick_block_b(B, Sp, E, Hp, itemsize, budget):
    """Largest batch tile that fits the budget, preferring MXU-aligned M and
    an even number of grid steps (v7x 2-TC balance)."""
    resident = E * 3 * Hp * itemsize + 3 * Hp * 4   # wqkv (single-buffered) + bqkv f32
    per_b = (
        2 * Sp * E * itemsize       # double-buffered x block
        + 2 * Sp * Hp * itemsize    # double-buffered out block
        + 4 * Sp * 3 * Hp           # qkv f32
        + 3 * Sp * Hp * itemsize    # q/k/v matmul-dtype copies
        + 4 * Sp * Sp               # scores f32
        + Sp * Sp * itemsize        # p in matmul dtype
        + 4 * Sp * Hp               # PV accumulator f32
    )
    divisors = [d for d in range(1, B + 1) if B % d == 0]
    feasible = [d for d in divisors if resident + d * per_b <= budget] or [1]
    aligned = [d for d in feasible if (d * Sp) % 256 == 0]
    block_b = max(aligned) if aligned else max(feasible)
    if (B // block_b) % 2 == 1:
        even = [d for d in feasible if (B // d) % 2 == 0]
        if even:
            cand = max(even)
            if 2 * cand >= block_b:     # don't shrink by more than 2x
                block_b = cand
    return block_b


def attention_head(x, wq, wk, wv, bq, bk, bv, *, block_b=None):
    """x: (B, S, E); wq/wk/wv: (E, H); bq/bk/bv: (H,). Returns (B, S, H)."""
    B, S, E = x.shape
    E2, H = wq.shape
    assert E2 == E

    itemsize = jnp.dtype(x.dtype).itemsize
    # Lane-dense (128-multiple) head dim and sublane-aligned seq length.
    Hp = _round_up(max(H, 128), 128)
    sublane = 8 * max(1, 4 // itemsize)             # 8 for f32, 16 for bf16
    Sp = _round_up(S, sublane)

    scale = 1.0 / math.sqrt(float(H))

    def pad_w(w):
        return jnp.pad(w, ((0, 0), (0, Hp - H))) if Hp != H else w

    def pad_b(b):
        return jnp.pad(b, (0, Hp - H)) if Hp != H else b

    # Fold the attention scale into the Q projection host-side.
    wqkv = jnp.concatenate([pad_w(wq * scale), pad_w(wk), pad_w(wv)], axis=1)   # (E, 3*Hp)
    bqkv = jnp.concatenate([pad_b(bq * scale), pad_b(bk), pad_b(bv)])
    bqkv = bqkv.reshape(1, 3 * Hp).astype(jnp.float32)
    wqkv = wqkv.astype(x.dtype)          # MXU operands in the activation dtype

    if Sp != S:
        x = jnp.pad(x, ((0, 0), (0, Sp - S), (0, 0)))

    budget = _vmem_budget_bytes()
    if block_b is None:
        block_b = _pick_block_b(B, Sp, E, Hp, itemsize, budget)
    assert B % block_b == 0

    grid = (B // block_b,)
    approx_recip = jnp.dtype(x.dtype) != jnp.dtype(jnp.float32)
    kernel = functools.partial(attention_head_kernel, hp=Hp, s_valid=S,
                               approx_recip=approx_recip)

    flops = 2 * B * Sp * E * 3 * Hp + 2 * 2 * B * Sp * Sp * Hp
    transcendentals = B * Sp * Sp
    bytes_accessed = (B * Sp * E * itemsize + E * 3 * Hp * itemsize
                      + 3 * Hp * 4 + B * Sp * Hp * itemsize)

    out_padded = pl.pallas_call(
        kernel,
        out_shape=jax.ShapeDtypeStruct((B, Sp, Hp), x.dtype),
        grid_spec=pltpu.PrefetchScalarGridSpec(
            num_scalar_prefetch=0,
            grid=grid,
            in_specs=[
                pl.BlockSpec((block_b, Sp, E), lambda b: (b, 0, 0)),   # x (streamed)
                pl.BlockSpec((E, 3 * Hp), lambda b: (0, 0),
                             pipeline_mode=pl.Buffered(1)),            # fused W (resident)
                pl.BlockSpec((1, 3 * Hp), lambda b: (0, 0),
                             pipeline_mode=pl.Buffered(1)),            # fused bias (resident)
            ],
            out_specs=pl.BlockSpec((block_b, Sp, Hp), lambda b: (b, 0, 0)),
        ),
        compiler_params=pltpu.CompilerParams(
            dimension_semantics=("parallel",),
            vmem_limit_bytes=budget,
        ),
        cost_estimate=pl.CostEstimate(
            flops=flops,
            transcendentals=transcendentals,
            bytes_accessed=bytes_accessed,
        ),
    )(x, wqkv, bqkv)

    out = out_padded
    if Sp != S:
        out = out[:, :S, :]
    if Hp != H:
        out = out[..., :H]
    return out


def reference_attention_head(x, wq, wk, wv, bq, bk, bv):
    """Pure-JAX reference mirroring the PyTorch module semantics."""
    q = jnp.einsum("bse,eh->bsh", x, wq) + bq
    k = jnp.einsum("bse,eh->bsh", x, wk) + bk
    v = jnp.einsum("bse,eh->bsh", x, wv) + bv
    scale = 1.0 / math.sqrt(q.shape[-1])
    scores = jnp.einsum("bqh,bkh->bqk", q, k) * scale
    weights = jax.nn.softmax(scores, axis=-1)
    return jnp.einsum("bqk,bkh->bqh", weights, v)


if __name__ == "__main__":
    # Small shapes consistent with the module's forward pass.
    batch, seq, embed_dim, head_dim = 2, 8, 32, 16

    key = jax.random.PRNGKey(0)
    kx, kwq, kwk, kwv, kbq, kbk, kbv = jax.random.split(key, 7)

    x = jax.random.normal(kx, (batch, seq, embed_dim), dtype=jnp.float32)

    # Deterministic parameter init (uniform, torch.nn.Linear-style bound).
    bound = 1.0 / math.sqrt(embed_dim)
    wq = jax.random.uniform(kwq, (embed_dim, head_dim), jnp.float32, -bound, bound)
    wk = jax.random.uniform(kwk, (embed_dim, head_dim), jnp.float32, -bound, bound)
    wv = jax.random.uniform(kwv, (embed_dim, head_dim), jnp.float32, -bound, bound)
    bq = jax.random.uniform(kbq, (head_dim,), jnp.float32, -bound, bound)
    bk = jax.random.uniform(kbk, (head_dim,), jnp.float32, -bound, bound)
    bv = jax.random.uniform(kbv, (head_dim,), jnp.float32, -bound, bound)

    out = attention_head(x, wq, wk, wv, bq, bk, bv)
    out = jax.block_until_ready(out)

    ref = reference_attention_head(x, wq, wk, wv, bq, bk, bv)
    assert out.shape == (batch, seq, head_dim)
    assert jnp.allclose(out, ref, atol=1e-3, rtol=1e-3), "mismatch vs reference"

    print("KERNEL_OK")
</pallas_src>

<mosaic_0001>
module attributes {stable_mosaic.version = 11 : i64} {
  func.func @attention_head_kernel(%arg0: i32, %arg1: memref<1x8x32xf32, #tpu.memory_space<vmem>>, %arg2: memref<32x384xf32, #tpu.memory_space<vmem>>, %arg3: memref<1x384xf32, #tpu.memory_space<vmem>>, %arg4: memref<1x8x128xf32, #tpu.memory_space<vmem>>) attributes {dimension_semantics = [#tpu.dimension_semantics<parallel>], iteration_bounds = array<i64: 2>, scalar_prefetch = 0 : i64, scratch_operands = 0 : i64, tpu.core_type = #tpu.core_type<tc>, window_params = [{transform_indices = @transform_0, window_bounds = array<i64: 1, 8, 32>}, {pipeline_mode = #tpu.pipeline_mode<synchronous>, transform_indices = @transform_1, window_bounds = array<i64: 32, 384>}, {pipeline_mode = #tpu.pipeline_mode<synchronous>, transform_indices = @transform_2, window_bounds = array<i64: 1, 384>}, {transform_indices = @transform_3, window_bounds = array<i64: 1, 8, 128>}]} {
    %c0 = arith.constant 0 : index
    %c0_0 = arith.constant 0 : index
    %c0_1 = arith.constant 0 : index
    %0 = vector.load %arg1[%c0, %c0_0, %c0_1] : memref<1x8x32xf32, #tpu.memory_space<vmem>>, vector<1x8x32xf32>
    %1 = vector.shape_cast %0 : vector<1x8x32xf32> to vector<8x32xf32>
    %c0_2 = arith.constant 0 : index
    %c0_3 = arith.constant 0 : index
    %2 = vector.load %arg2[%c0_2, %c0_3] : memref<32x384xf32, #tpu.memory_space<vmem>>, vector<32x384xf32>
    %cst = arith.constant dense<0.000000e+00> : vector<8x384xf32>
    %3 = tpu.matmul %1, %2, %cst {dimension_numbers = #tpu.dot_dimension_numbers<[1], [0], [0], [1], [0, 0, 1, 1], [], []>} : vector<8x32xf32>, vector<32x384xf32>, vector<8x384xf32> -> vector<8x384xf32>
    %c0_4 = arith.constant 0 : index
    %c0_5 = arith.constant 0 : index
    %4 = vector.load %arg3[%c0_4, %c0_5] : memref<1x384xf32, #tpu.memory_space<vmem>>, vector<1x384xf32>
    %5 = vector.broadcast %4 : vector<1x384xf32> to vector<8x384xf32>
    %6 = arith.addf %3, %5 : vector<8x384xf32>
    %7 = vector.extract_strided_slice %6 {offsets = [0, 0], sizes = [8, 128], strides = [1, 1]} : vector<8x384xf32> to vector<8x128xf32>
    %8 = vector.shape_cast %7 : vector<8x128xf32> to vector<1x8x128xf32>
    %9 = vector.extract_strided_slice %6 {offsets = [0, 128], sizes = [8, 128], strides = [1, 1]} : vector<8x384xf32> to vector<8x128xf32>
    %10 = vector.shape_cast %9 : vector<8x128xf32> to vector<1x8x128xf32>
    %11 = vector.extract_strided_slice %6 {offsets = [0, 256], sizes = [8, 128], strides = [1, 1]} : vector<8x384xf32> to vector<8x128xf32>
    %12 = vector.shape_cast %11 : vector<8x128xf32> to vector<1x8x128xf32>
    "tpu.trace_start"() <{level = 10 : i32, message = "bqh,bkh->bqk"}> : () -> ()
    %cst_6 = arith.constant dense<0.000000e+00> : vector<1x8x8xf32>
    %13 = tpu.matmul %8, %10, %cst_6 {dimension_numbers = #tpu.dot_dimension_numbers<[2], [2], [1], [1], [0, 0, 0, 1, 1, 1], [0], [0]>} : vector<1x8x128xf32>, vector<1x8x128xf32>, vector<1x8x8xf32> -> vector<1x8x8xf32>
    "tpu.trace_stop"() : () -> ()
    %cst_7 = arith.constant dense<0xFF800000> : vector<1x8xf32>
    %14 = vector.multi_reduction <maximumf>, %13, %cst_7 [2] : vector<1x8x8xf32> to vector<1x8xf32>
    %15 = vector.shape_cast %14 : vector<1x8xf32> to vector<1x8x1xf32>
    %16 = vector.broadcast %15 : vector<1x8x1xf32> to vector<1x8x8xf32>
    %17 = arith.subf %13, %16 : vector<1x8x8xf32>
    %18 = math.exp %17 : vector<1x8x8xf32>
    %cst_8 = arith.constant dense<0.000000e+00> : vector<1x8xf32>
    %19 = vector.multi_reduction <add>, %18, %cst_8 [2] : vector<1x8x8xf32> to vector<1x8xf32>
    %20 = vector.shape_cast %19 : vector<1x8xf32> to vector<1x8x1xf32>
    "tpu.trace_start"() <{level = 10 : i32, message = "bqk,bkh->bqh"}> : () -> ()
    %cst_9 = arith.constant dense<0.000000e+00> : vector<1x8x128xf32>
    %21 = tpu.matmul %18, %12, %cst_9 {dimension_numbers = #tpu.dot_dimension_numbers<[2], [1], [1], [2], [0, 0, 0, 1, 1, 2], [0], [0]>} : vector<1x8x8xf32>, vector<1x8x128xf32>, vector<1x8x128xf32> -> vector<1x8x128xf32>
    "tpu.trace_stop"() : () -> ()
    %22 = tpu.reciprocal %20 : vector<1x8x1xf32> -> vector<1x8x1xf32>
    %23 = vector.broadcast %22 : vector<1x8x1xf32> to vector<1x8x128xf32>
    %24 = arith.mulf %21, %23 : vector<1x8x128xf32>
    %c0_10 = arith.constant 0 : index
    %c0_11 = arith.constant 0 : index
    %c0_12 = arith.constant 0 : index
    %25 = vector.load %arg4[%c0_10, %c0_11, %c0_12] : memref<1x8x128xf32, #tpu.memory_space<vmem>>, vector<1x8x128xf32>
    tpu.vector_store %arg4[%c0_10, %c0_11, %c0_12], %24 {strides = array<i32>} : memref<1x8x128xf32, #tpu.memory_space<vmem>>, vector<1x8x128xf32>,
    return
  }
  func.func @transform_0(%arg0: i32) -> (i32, i32, i32) {
    %c0_i32 = arith.constant 0 : i32
    %c0_i32_0 = arith.constant 0 : i32
    %c0_i32_1 = arith.constant 0 : i32
    return %arg0, %c0_i32, %c0_i32_0 : i32, i32, i32
  }
  func.func @transform_1(%arg0: i32) -> (i32, i32) {
    %c0_i32 = arith.constant 0 : i32
    %c0_i32_0 = arith.constant 0 : i32
    %c0_i32_1 = arith.constant 0 : i32
    return %c0_i32, %c0_i32_0 : i32, i32
  }
  func.func @transform_2(%arg0: i32) -> (i32, i32) {
    %c0_i32 = arith.constant 0 : i32
    %c0_i32_0 = arith.constant 0 : i32
    %c0_i32_1 = arith.constant 0 : i32
    return %c0_i32, %c0_i32_0 : i32, i32
  }
  func.func @transform_3(%arg0: i32) -> (i32, i32, i32) {
    %c0_i32 = arith.constant 0 : i32
    %c0_i32_0 = arith.constant 0 : i32
    %c0_i32_1 = arith.constant 0 : i32
    return %arg0, %c0_i32, %c0_i32_0 : i32, i32, i32
  }
}

</mosaic_0001>

<llo_original>
// kernel: tpu_custom_call.1
$region0: #{tpu_custom_call.1}
  #allocation0 [shape = 'u32[]', space=smem, size = 0x4, offset = 0x4, fixed_abs, tag = 'smem constant byte address 0x4 - core index']
  #allocation1 [shape = 'u32[72,128]{1,0:T(1,128)}', space=vmem, size = 0x9000, scoped, tag = 'internal scratch']
  %s0 = inlined_call_operand.hbm [shape: f32[2,8,32], index: 0, kind: input, shape index: {}]
  %s1 = inlined_call_operand.hbm [shape: f32[32,384], index: 1, kind: input, shape index: {}]
  %s2 = inlined_call_operand.hbm [shape: f32[1,384], index: 2, kind: input, shape index: {}]
  %s3 = inlined_call_operand.hbm [shape: f32[2,8,128], index: 3, kind: output, shape index: {}]
  %s4 = sld [smem:[#allocation0]]
  $region57: #{tpu_custom_call.1} parent=0
    _
  %s6 = ssub.s32 1, %s4
  %s7 = scalar_select 0, %s6, %s4
  $region1: #{tpu_custom_call.1} parent=0
    #allocation2 [shape = 'u8[8192]{0}', space=vmem, size = 0x2000, scoped, tag = 'input window, operand 0']
    #allocation3 [shape = 's32[2]{0}', space=sflag, size = 0x8, scoped, tag = 'scoped memory for tpu_custom_call.1']
    #allocation4 [shape = 's32[2]{0}', space=sflag, size = 0x8, scoped, tag = 'scoped memory for tpu_custom_call.1']
    #allocation5 [shape = 'u8[49152]{0}', space=vmem, size = 0xc000, scoped, tag = 'input window, operand 1, single buffered']
    #allocation6 [shape = 's32[1]{0}', space=sflag, size = 0x4, scoped, tag = 'scoped memory for tpu_custom_call.1']
    #allocation7 [shape = 'u8[1536]{0}', space=vmem, size = 0x800, scoped, tag = 'input window, operand 2, single buffered']
    #allocation8 [shape = 'u8[8192]{0}', space=vmem, size = 0x2000, scoped, tag = 'output window, operand 0']
    %8 = vsyncpa [#allocation3], 0
    %s9 = scalar_lea.sflag [#allocation3], 1
    %10 = vsyncpa %s9, 0
    %11 = vsyncpa [#allocation6], 0
    %12 = vsyncpa [#allocation4], 0
    %s13 = scalar_lea.sflag [#allocation4], 1
    %14 = vsyncpa %s13, 0
    loop: start=0, step=1, limit=4
    $region2: #{tpu_custom_call.1} parent=1 // loop_pre_header
      _
    $region3: #{tpu_custom_call.1} parent=1 // loop_header
      %s16 = sphi 0, %s20
      %p17 = scmp.ge.s32.totalorder %s16, 4
      %s26 = sphi 0, %s28
      %s29 = sphi 0, %s26
      %s30 = sphi 0, %s29
      %s46 = sphi 0, %s30
      %s50 = sphi 0, %s50
      %s52 = sphi 0, %s50
      %s53 = sphi 0, %s52
      %s67 = sphi 0, %s53
      %s71 = sphi 0, %s71
      %s73 = sphi 0, %s71
      %s74 = sphi 0, %s73
      %s88 = sphi 0, %s74
      %s94 = sphi 0, %s96
      %s97 = sphi 0, %s94
      %s98 = sphi 0, %s97
      %s114 = sphi 0, %s98
    $region4: #{tpu_custom_call.1} parent=1 // loop_header_branch
      %19 = sbr.rel (%p17) target = $region8
    $region5: #{tpu_custom_call.1} parent=1 // loop_body
      %s21 = ssub.s32 %s16, 1
      %s22 = ssub.s32 %s16, 2
      %s23 = sadd.s32 %s16, 1
      %s24 = ssub.s32 %s16, %s23
      %p25 = scmp.eq.s32.totalorder %s24, 0
      %s27 = sadd.s32 %s26, 1
      %s28 = scalar_select %p25, %s26, %s27
      %p31 = pneg %p25
      %p32 = scmp.eq.s32.totalorder %s16, 1
      %p33 = por %p31, %p32
      %p34 = scmp.ne.s32.totalorder %s26, %s29
      %p35 = scmp.eq.s32.totalorder %s16, 0
      %p36 = por %p34, %p35
      %p37 = scmp.ne.s32.totalorder %s26, %s29
      %p38 = scmp.eq.s32.totalorder %s21, 1
      %p39 = por %p37, %p38
      %p40 = scmp.ne.s32.totalorder %s29, %s30
      %p41 = scmp.eq.s32.totalorder %s21, 0
      %p42 = por %p40, %p41
      %p43 = scmp.ne.s32.totalorder %s29, %s30
      %p44 = scmp.eq.s32.totalorder %s22, 1
      %p45 = por %p43, %p44
      %p47 = scmp.ne.s32.totalorder %s30, %s46
      %p48 = scmp.eq.s32.totalorder %s22, 0
      %p49 = por %p47, %p48
      %s51 = sadd.s32 %s50, 1
      %p54 = scmp.eq.s32.totalorder %s16, 1
      %p55 = scmp.ne.s32.totalorder %s50, %s52
      %p56 = scmp.eq.s32.totalorder %s16, 0
      %p57 = por %p55, %p56
      %p58 = scmp.ne.s32.totalorder %s50, %s52
      %p59 = scmp.eq.s32.totalorder %s21, 1
      %p60 = por %p58, %p59
      %p61 = scmp.ne.s32.totalorder %s52, %s53
      %p62 = scmp.eq.s32.totalorder %s21, 0
      %p63 = por %p61, %p62
      %p64 = scmp.ne.s32.totalorder %s52, %s53
      %p65 = scmp.eq.s32.totalorder %s22, 1
      %p66 = por %p64, %p65
      %p68 = scmp.ne.s32.totalorder %s53, %s67
      %p69 = scmp.eq.s32.totalorder %s22, 0
      %p70 = por %p68, %p69
      %s72 = sadd.s32 %s71, 1
      %p75 = scmp.eq.s32.totalorder %s16, 1
      %p76 = scmp.ne.s32.totalorder %s71, %s73
      %p77 = scmp.eq.s32.totalorder %s16, 0
      %p78 = por %p76, %p77
      %p79 = scmp.ne.s32.totalorder %s71, %s73
      %p80 = scmp.eq.s32.totalorder %s21, 1
      %p81 = por %p79, %p80
      %p82 = scmp.ne.s32.totalorder %s73, %s74
      %p83 = scmp.eq.s32.totalorder %s21, 0
      %p84 = por %p82, %p83
      %p85 = scmp.ne.s32.totalorder %s73, %s74
      %p86 = scmp.eq.s32.totalorder %s22, 1
      %p87 = por %p85, %p86
      %p89 = scmp.ne.s32.totalorder %s74, %s88
      %p90 = scmp.eq.s32.totalorder %s22, 0
      %p91 = por %p89, %p90
      %s92 = ssub.s32 %s16, %s23
      %p93 = scmp.eq.s32.totalorder %s92, 0
      %s95 = sadd.s32 %s94, 1
      %s96 = scalar_select %p93, %s94, %s95
      %p99 = pneg %p93
      %p100 = scmp.eq.s32.totalorder %s16, 1
      %p101 = por %p99, %p100
      %p102 = scmp.ne.s32.totalorder %s94, %s97
      %p103 = scmp.eq.s32.totalorder %s16, 0
      %p104 = por %p102, %p103
      %p105 = scmp.ne.s32.totalorder %s94, %s97
      %p106 = scmp.eq.s32.totalorder %s21, 1
      %p107 = por %p105, %p106
      %p108 = scmp.ne.s32.totalorder %s97, %s98
      %p109 = scmp.eq.s32.totalorder %s21, 0
      %p110 = por %p108, %p109
      %p111 = scmp.ne.s32.totalorder %s97, %s98
      %p112 = scmp.eq.s32.totalorder %s22, 1
      %p113 = por %p111, %p112
      %p115 = scmp.ne.s32.totalorder %s98, %s114
      %p116 = scmp.eq.s32.totalorder %s22, 0
      %p117 = por %p115, %p116
      %p118 = scmp.le.s32.totalorder 1, %s16
      %p119 = scmp.lt.s32.totalorder %s16, 3
      %p120 = pnand %p118, %p119
      %p121 = pneg %p120
      // Predicated region
      $region9: #{tpu_custom_call.1} parent=5 // pred_check
        _
      $region10: #{tpu_custom_call.1} parent=5 // pred_check_branch
        %123 = sbr.rel (%p120) target = $region12
      $region11: #{tpu_custom_call.1} parent=5 // pred_region
        %s124 = ssub.s32 %s16, 1
        // Predicated region
        $region13: #{tpu_custom_call.1} parent=11 // pred_check
          %p125 = pneg %p63
        $region14: #{tpu_custom_call.1} parent=11 // pred_check_branch
          %127 = sbr.rel (%p125) target = $region16
        $region15: #{tpu_custom_call.1} parent=11 // pred_region
          %129 = vsyncadd [#allocation6], 0
          %s130 = sshll.u32 %s1, 4
          %s131 = int_to_ptr.hbm [resolvable:$true] %s130
          %s132 = sshll.u32 [#allocation5], 4
          %s133 = int_to_ptr.vmem [resolvable:$true] %s132
          %138 = dma.hbm_to_vmem [thread:$0]  %s131, 1536, %s133, [#allocation6], 384, 384, 24
        $region16: #{tpu_custom_call.1} parent=11 // pred_fallthru
          _
        // Predicated region
        $region17: #{tpu_custom_call.1} parent=11 // pred_check
          %p139 = pneg %p84
        $region18: #{tpu_custom_call.1} parent=11 // pred_check_branch
          %141 = sbr.rel (%p139) target = $region20
        $region19: #{tpu_custom_call.1} parent=11 // pred_region
          %143 = vsyncadd [#allocation6], 0
          %s145 = sshll.u32 %s2, 4
          %s146 = int_to_ptr.hbm [resolvable:$true] %s145
          %s147 = sshll.u32 [#allocation7], 4
          %s148 = int_to_ptr.vmem [resolvable:$true] %s147
          %150 = dma.hbm_to_vmem [thread:$0]  %s146, 48, %s148, [#allocation6]
        $region20: #{tpu_custom_call.1} parent=11 // pred_fallthru
          _
      $region12: #{tpu_custom_call.1} parent=5 // pred_fallthru
        _
      %p151 = scmp.lt.s32.totalorder %s16, 2
      // Predicated region
      $region21: #{tpu_custom_call.1} parent=5 // pred_check
        %p152 = pneg %p151
      $region22: #{tpu_custom_call.1} parent=5 // pred_check_branch
        %154 = sbr.rel (%p152) target = $region24
      $region23: #{tpu_custom_call.1} parent=5 // pred_region
        // Predicated region
        $region25: #{tpu_custom_call.1} parent=23 // pred_check
          %p155 = pneg %p36
        $region26: #{tpu_custom_call.1} parent=23 // pred_check_branch
          %157 = sbr.rel (%p155) target = $region28
        $region27: #{tpu_custom_call.1} parent=23 // pred_region
          %s158 = sand.u32 %s26, 1
          %s159 = scalar_lea.sflag [#allocation3], %s158
          %s160 = sand.u32 %s26, 1
          %s161 = smul.addr %s160, 8
          %s162 = scalar_lea.vmem [#allocation2], %s161
          %164 = vsyncadd %s159, 0
          %s165 = smul.addr %s16, 8
          %s166 = scalar_lea.hbm %s0, %s165
          %s168 = sshll.u32 %s166, 4
          %s169 = int_to_ptr.hbm [resolvable:$true] %s168
          %s170 = sshll.u32 %s162, 4
          %s171 = int_to_ptr.vmem [resolvable:$true] %s170
          %173 = dma.hbm_to_vmem [thread:$0]  %s169, 128, %s171, %s159
        $region28: #{tpu_custom_call.1} parent=23 // pred_fallthru
          _
      $region24: #{tpu_custom_call.1} parent=5 // pred_fallthru
        _
      %p174 = scmp.le.s32.totalorder 1, %s16
      %p175 = scmp.lt.s32.totalorder %s16, 3
      %p176 = pnand %p174, %p175
      %p177 = pneg %p176
      // Predicated region
      $region29: #{tpu_custom_call.1} parent=5 // pred_check
        _
      $region30: #{tpu_custom_call.1} parent=5 // pred_check_branch
        %179 = sbr.rel (%p176) target = $region32
      $region31: #{tpu_custom_call.1} parent=5 // pred_region
        %s180 = ssub.s32 %s16, 1
        %s181 = sand.u32 %s29, 1
        %s182 = scalar_lea.sflag [#allocation3], %s181
        %s183 = sand.u32 %s29, 1
        %s184 = smul.addr %s183, 8
        %s185 = scalar_lea.vmem [#allocation2], %s184
        // Predicated region
        $region33: #{tpu_custom_call.1} parent=31 // pred_check
          %p186 = pneg %p42
        $region34: #{tpu_custom_call.1} parent=31 // pred_check_branch
          %188 = sbr.rel (%p186) target = $region36
        $region35: #{tpu_custom_call.1} parent=31 // pred_region
          %190 = dma.done %s182, 128
        $region36: #{tpu_custom_call.1} parent=31 // pred_fallthru
          _
        // Predicated region
        $region37: #{tpu_custom_call.1} parent=31 // pred_check
          %p191 = pneg %p63
        $region38: #{tpu_custom_call.1} parent=31 // pred_check_branch
          %193 = sbr.rel (%p191) target = $region40
        $region39: #{tpu_custom_call.1} parent=31 // pred_region
          %195 = dma.done [#allocation6], 1536
        $region40: #{tpu_custom_call.1} parent=31 // pred_fallthru
          _
        // Predicated region
        $region41: #{tpu_custom_call.1} parent=31 // pred_check
          %p196 = pneg %p84
        $region42: #{tpu_custom_call.1} parent=31 // pred_check_branch
          %198 = sbr.rel (%p196) target = $region44
        $region43: #{tpu_custom_call.1} parent=31 // pred_region
          %200 = dma.done [#allocation6], 48
        $region44: #{tpu_custom_call.1} parent=31 // pred_fallthru
          _
        %s201 = sand.u32 %s29, 1
        %s202 = scalar_lea.sflag [#allocation3], %s201
        %s203 = sand.u32 %s29, 1
        %s204 = smul.addr %s203, 8
        %s205 = scalar_lea.vmem [#allocation2], %s204
        %p206 = pneg %p42
        %p207 = pneg %p39
        %p208 = pneg %p63
        %p209 = pneg %p60
        %p210 = pneg %p84
        %p211 = pneg %p81
        %p212 = pneg %p110
        %p213 = pneg %p107
        %s214 = sand.u32 %s97, 1
        %s215 = scalar_lea.sflag [#allocation4], %s214
        %s216 = sand.u32 %s97, 1
        %s217 = smul.addr %s216, 8
        %s218 = scalar_lea.vmem [#allocation8], %s217
        %v219 = vld [vmem:[%s185] sm:$0xff]
        %v220 = vld [vmem:[#allocation5] sm:$0xff]
        %v221 = vld [vmem:[#allocation5 + $0x8] sm:$0xff]
        %v222 = vld [vmem:[#allocation5 + $0x10] sm:$0xff]
        %v223 = vld [vmem:[#allocation5 + $0x18] sm:$0xff]
        %v224 = vld [vmem:[#allocation5 + $0x20] sm:$0xff]
        %v225 = vld [vmem:[#allocation5 + $0x28] sm:$0xff]
        %v226 = vld [vmem:[#allocation5 + $0x30] sm:$0xff]
        %v227 = vld [vmem:[#allocation5 + $0x38] sm:$0xff]
        %v228 = vld [vmem:[#allocation5 + $0x40] sm:$0xff]
        %v229 = vld [vmem:[#allocation5 + $0x48] sm:$0xff]
        %v230 = vld [vmem:[#allocation5 + $0x50] sm:$0xff]
        %v231 = vld [vmem:[#allocation5 + $0x58] sm:$0xff]
        %v232 = vld [vmem:[#allocation7] sm:$0x7]
        %v234 = vperm.slane %v232, 0
        %v235 = vperm.slane %v232, 1
        %v236 = vperm.slane %v232, 2
        %vm240 = vcmask 261120
        %v242 = vsel %vm240, %v219, 0
        %244 = vmatpush.msra.mxu0 0.0
        %245 = vmatpush.msra.mxu0 0.0
        %246 = vmatpush.msra.mxu0 0.0
        %247 = vmatpush.msra.mxu0 0.0
        %248 = vmatpush.msra.mxu0 0.0
        %249 = vmatpush.msra.mxu0 0.0
        %250 = vmatpush.msra.mxu0 0.0
        %251 = vmatpush.msra.mxu0 0.0
        %252 = vmatpush.msra.mxu0 0.0
        %253 = vmatpush.msra.mxu0 0.0
        %254 = vmatpush.msra.mxu0 0.0
        %255 = vmatpush.msra.mxu0 0.0
        %256 = vmatpush.msra.mxu0 %v229
        %257 = vmatpush.msra.mxu0 %v226
        %258 = vmatpush.msra.mxu0 %v223
        %259 = vmatpush.msra.mxu0 %v220
        %260 = vmatmul.f32.gmra.mxu0 %v242
        %v261 = vpop.f32.mrf.mxu0
        %v262 = vadd.f32 %v234, %v261
        %263 = vdwg.mxu0
        %264 = vmatpush.msra.mxu0 0.0
        %265 = vmatpush.msra.mxu0 0.0
        %266 = vmatpush.msra.mxu0 0.0
        %267 = vmatpush.msra.mxu0 0.0
        %268 = vmatpush.msra.mxu0 0.0
        %269 = vmatpush.msra.mxu0 0.0
        %270 = vmatpush.msra.mxu0 0.0
        %271 = vmatpush.msra.mxu0 0.0
        %272 = vmatpush.msra.mxu0 0.0
        %273 = vmatpush.msra.mxu0 0.0
        %274 = vmatpush.msra.mxu0 0.0
        %275 = vmatpush.msra.mxu0 0.0
        %276 = vmatpush.msra.mxu0 %v230
        %277 = vmatpush.msra.mxu0 %v227
        %278 = vmatpush.msra.mxu0 %v224
        %279 = vmatpush.msra.mxu0 %v221
        %280 = vmatmul.f32.gmra.mxu0 %v242
        %v281 = vpop.f32.mrf.mxu0
        %v282 = vadd.f32 %v235, %v281
        %283 = vdwg.mxu0
        %284 = vmatpush.msra.mxu0 0.0
        %285 = vmatpush.msra.mxu0 0.0
        %286 = vmatpush.msra.mxu0 0.0
        %287 = vmatpush.msra.mxu0 0.0
        %288 = vmatpush.msra.mxu0 0.0
        %289 = vmatpush.msra.mxu0 0.0
        %290 = vmatpush.msra.mxu0 0.0
        %291 = vmatpush.msra.mxu0 0.0
        %292 = vmatpush.msra.mxu0 0.0
        %293 = vmatpush.msra.mxu0 0.0
        %294 = vmatpush.msra.mxu0 0.0
        %295 = vmatpush.msra.mxu0 0.0
        %296 = vmatpush.msra.mxu0 %v231
        %297 = vmatpush.msra.mxu0 %v228
        %298 = vmatpush.msra.mxu0 %v225
        %299 = vmatpush.msra.mxu0 %v222
        %300 = vmatmul.f32.gmra.mxu0 %v242
        %v301 = vpop.f32.mrf.mxu0
        %v302 = vadd.f32 %v236, %v301
        %303 = vdwg.mxu0
        %304 = vmatpush.xpose.msra.mxu0 0.0
        %305 = vmatpush.xpose.msra.mxu0 0.0
        %306 = vmatpush.xpose.msra.mxu0 0.0
        %307 = vmatpush.xpose.msra.mxu0 0.0
        %308 = vmatpush.xpose.msra.mxu0 0.0
        %309 = vmatpush.xpose.msra.mxu0 0.0
        %310 = vmatpush.xpose.msra.mxu0 0.0
        %311 = vmatpush.xpose.msra.mxu0 0.0
        %312 = vmatpush.xpose.msra.mxu0 0.0
        %313 = vmatpush.xpose.msra.mxu0 0.0
        %314 = vmatpush.xpose.msra.mxu0 0.0
        %315 = vmatpush.xpose.msra.mxu0 0.0
        %316 = vmatpush.xpose.msra.mxu0 0.0
        %317 = vmatpush.xpose.msra.mxu0 0.0
        %318 = vmatpush.xpose.msra.mxu0 0.0
        %319 = vmatpush.xpose.msra.mxu0 %v282
        %320 = vmatmul.f32.gmra.mxu0 %v262
        %v321 = vpop.f32.mrf.mxu0
        %v322 = vadd.f32 0.0, %v321
        %323 = vdwg.mxu0
        %vm324 = vcmask 64512
        %v325 = vsel %vm324, %v322, -inf
        %326 = vmax.xlane.f32.xlu0 %v325
        %v327 = vpop.xlane.xlu0 %326
        %v328 = vsub.f32 %v322, %v327
        %v329 = vmul.f32 %v328, 1.442695
        %v330 = vpow.pop %v329
        %v331 = vsel %vm324, %v330, 0.0
        %332 = vadd.xlane.f32.xlu0 %v331
        %v333 = vpop.xlane.xlu0 %332
        %v335 = vsel %vm324, %v330, 0
        %337 = vmatpush.msra.mxu0 0.0
        %338 = vmatpush.msra.mxu0 0.0
        %339 = vmatpush.msra.mxu0 0.0
        %340 = vmatpush.msra.mxu0 0.0
        %341 = vmatpush.msra.mxu0 0.0
        %342 = vmatpush.msra.mxu0 0.0
        %343 = vmatpush.msra.mxu0 0.0
        %344 = vmatpush.msra.mxu0 0.0
        %345 = vmatpush.msra.mxu0 0.0
        %346 = vmatpush.msra.mxu0 0.0
        %347 = vmatpush.msra.mxu0 0.0
        %348 = vmatpush.msra.mxu0 0.0
        %349 = vmatpush.msra.mxu0 0.0
        %350 = vmatpush.msra.mxu0 0.0
        %351 = vmatpush.msra.mxu0 0.0
        %352 = vmatpush.msra.mxu0 %v302
        %353 = vmatmul.f32.gmra.mxu0 %v335
        %v354 = vpop.f32.mrf.mxu0
        %v355 = vadd.f32 0.0, %v354
        %356 = vdwg.mxu0
        %v357 = vrcp.pop %v333
        %v358 = vmul.f32 %v333, %v357
        %v359 = vsub.f32 1.0, %v358
        %v360 = vmul.f32 %v357, %v359
        %v361 = vadd.f32 %v357, %v360
        %vm362 = vweird.f32 %v333
        %vm363 = vweird.f32 %v357
        %vm364 = vmor %vm362, %vm363
        %v365 = vsel %vm364, %v357, %v361
        %v366 = vand.u32 2147483647, %v333
        %vm367 = vcmp.eq.f32.partialorder %v366, 8.507059e+37
        %v368 = vand.u32 %v333, 2147483648
        %v369 = vor.u32 1.1754944e-38, %v368
        %v370 = vsel %vm367, %v369, %v365
        %v371 = vmul.f32 %v355, %v370
        %372 = vst [vmem:[%s218] sm:$0xff] %v371
        %s373 = sand.u32 %s97, 1
        %s374 = scalar_lea.sflag [#allocation4], %s373
        %s375 = sand.u32 %s97, 1
        %s376 = smul.addr %s375, 8
        %s377 = scalar_lea.vmem [#allocation8], %s376
        // Predicated region
        $region45: #{tpu_custom_call.1} parent=31 // pred_check
          %p378 = pneg %p107
        $region46: #{tpu_custom_call.1} parent=31 // pred_check_branch
          %380 = sbr.rel (%p378) target = $region48
        $region47: #{tpu_custom_call.1} parent=31 // pred_region
          %382 = vsyncadd %s374, 0
          %s383 = smul.addr %s21, 8
          %s384 = scalar_lea.hbm %s3, %s383
          %s386 = sshll.u32 %s377, 4
          %s387 = int_to_ptr.vmem [resolvable:$true] %s386
          %s388 = sshll.u32 %s384, 4
          %s389 = int_to_ptr.hbm [resolvable:$true] %s388
          %391 = dma.vmem_to_hbm [thread:$0]  %s387, 128, %s389, %s374
        $region48: #{tpu_custom_call.1} parent=31 // pred_fallthru
          _
      $region32: #{tpu_custom_call.1} parent=5 // pred_fallthru
        _
      %p392 = scmp.le.s32.totalorder 2, %s16
      // Predicated region
      $region49: #{tpu_custom_call.1} parent=5 // pred_check
        %p393 = pneg %p392
      $region50: #{tpu_custom_call.1} parent=5 // pred_check_branch
        %395 = sbr.rel (%p393) target = $region52
      $region51: #{tpu_custom_call.1} parent=5 // pred_region
        %s396 = ssub.s32 %s16, 2
        // Predicated region
        $region53: #{tpu_custom_call.1} parent=51 // pred_check
          %p397 = pneg %p113
        $region54: #{tpu_custom_call.1} parent=51 // pred_check_branch
          %399 = sbr.rel (%p397) target = $region56
        $region55: #{tpu_custom_call.1} parent=51 // pred_region
          %s400 = sand.u32 %s98, 1
          %s401 = scalar_lea.sflag [#allocation4], %s400
          %s402 = sand.u32 %s98, 1
          %s403 = smul.addr %s402, 8
          %s404 = scalar_lea.vmem [#allocation8], %s403
          %406 = dma.done %s401, 128
        $region56: #{tpu_custom_call.1} parent=51 // pred_fallthru
          _
      $region52: #{tpu_custom_call.1} parent=5 // pred_fallthru
        _
    $region6: #{tpu_custom_call.1} parent=1 // loop_footer
      %s20 = sadd.s32 1, %s16
    $region7: #{tpu_custom_call.1} parent=1 // loop_footer_branch
      %15 = sbr.rel target = $region3
    $region8: #{tpu_custom_call.1} parent=1 // loop_exit
      _
    %407 = vsyncpa [#allocation3], 1
    %s408 = scalar_lea.sflag [#allocation3], 1
    %409 = vsyncpa %s408, 1
    %410 = vsyncpa [#allocation6], 1
    %411 = vsyncpa [#allocation4], 1
    %s412 = scalar_lea.sflag [#allocation4], 1
    %413 = vsyncpa %s412, 1

</llo_original>
